<compile_context>
chip_gen: v5e
topology: v5e:2x2
jax: 0.10.0
libtpu: 0.0.40
codegen_flags: <defaults>
</compile_context>

<pallas_src>
import functools

import jax
import jax.numpy as jnp
from jax.experimental import pallas as pl
from jax.experimental.pallas import tpu as pltpu


def _soft_ce_kernel(x_ref, t_ref, nll_ref, smooth_ref, *,
                    ignore_index, h, w, th, tw, mask_rows, mask_cols):
    rb = pl.program_id(1)   # row-block index (parallel)
    cb = pl.program_id(2)   # col-block index (arbitrary / reduction)

    # Per-(n, rb) narrow accumulators live in the resident output blocks.
    @pl.when(cb == 0)
    def _():
        nll_ref[...] = jnp.zeros_like(nll_ref)
        smooth_ref[...] = jnp.zeros_like(smooth_ref)

    x = x_ref[0].astype(jnp.float32)          # (C, TH, TW), class dim is a leading dim
    t = t_ref[0]                              # (TH, TW) int32 targets
    C = x.shape[0]

    # Stable log-sum-exp over the class (leading) axis -> pure VPU adds, no XLU.
    m = jnp.max(x, axis=0)                                         # (TH, TW)
    lse = jnp.log(jnp.sum(jnp.exp(x - m[None]), axis=0))           # (TH, TW)
    logz = m + lse                                                 # (TH, TW)
    row_sum = jnp.sum(x, axis=0)                                   # (TH, TW)

    # Gather x[target] via one-hot select over the class axis.
    cls = jax.lax.broadcasted_iota(jnp.int32, x.shape, 0)          # (C, TH, TW)
    x_t = jnp.sum(jnp.where(cls == t[None], x, 0.0), axis=0)       # (TH, TW)

    nll = logz - x_t                               # -log p[target]
    smooth = jnp.float32(C) * logz - row_sum       # -sum_c log p[c]

    keep = t != ignore_index                       # (TH, TW)
    if mask_rows:
        r = rb * th + jax.lax.broadcasted_iota(jnp.int32, (th, tw), 0)
        keep = jnp.logical_and(keep, r < h)
    if mask_cols:
        c = cb * tw + jax.lax.broadcasted_iota(jnp.int32, (th, tw), 1)
        keep = jnp.logical_and(keep, c < w)

    # Select-based masking (NOT multiplicative) so tail garbage can never produce NaN.
    nll = jnp.where(keep, nll, 0.0)
    smooth = jnp.where(keep, smooth, 0.0)

    # Reduce the block to a scalar (sublane reduce then lane reduce) and accumulate into
    # the narrow 128-lane resident output block; only ~128 f32 per (n, rb) hit HBM.
    nll_s = jnp.sum(jnp.sum(nll, axis=0, keepdims=True), axis=1, keepdims=True)        # (1,1)
    smooth_s = jnp.sum(jnp.sum(smooth, axis=0, keepdims=True), axis=1, keepdims=True)  # (1,1)

    nll_ref[...] += jnp.broadcast_to(nll_s.reshape(1, 1, 1, 1), nll_ref.shape)
    smooth_ref[...] += jnp.broadcast_to(smooth_s.reshape(1, 1, 1, 1), smooth_ref.shape)


def _pick_tiles(C, H, W, itemsize, target_bytes=2 * 1024 * 1024):
    """Pick (TH, TW) so one logits block is ~target_bytes, counting lane padding of W."""
    w_pad = ((W + 127) // 128) * 128            # lane-padded row width in VMEM/HBM tiles
    min_rows = H if H < 8 else 8                # sublane granularity (or full H if tiny)
    bytes_min_block = C * min_rows * w_pad * itemsize
    if bytes_min_block <= target_bytes:
        # Full-width blocks; tile H only.
        TW = W
        rows = target_bytes // max(C * w_pad * itemsize, 1)
        TH = H if rows >= H else max(8, (rows // 8) * 8)
    else:
        # Large C*W: tile W too.
        TH = min_rows
        cols = target_bytes // max(C * TH * itemsize, 1)
        TW = max(128, (cols // 128) * 128)
        if TW >= W:
            TW = W
    return TH, TW


def soft_cross_entropy_loss(y_pred, y_true, *, smooth_factor, ignore_index=-100,
                            reduction="mean"):
    """Pallas implementation of SoftCrossEntropyLoss.forward (dim=1).

    y_pred: (N, C, H, W) float logits (any float dtype; compute is f32 in-kernel)
    y_true: (N, H, W) int labels (ignore_index marks ignored pixels)
    """
    N, C, H, W = y_pred.shape
    M = N * H * W

    t = y_true if y_true.dtype == jnp.int32 else y_true.astype(jnp.int32)

    itemsize = jnp.dtype(y_pred.dtype).itemsize
    TH, TW = _pick_tiles(C, H, W, itemsize)
    RB = pl.cdiv(H, TH)
    CB = pl.cdiv(W, TW)
    mask_rows = (TH < H) and (H % TH != 0)
    mask_cols = (TW < W) and (W % TW != 0)

    kernel = functools.partial(
        _soft_ce_kernel,
        ignore_index=ignore_index, h=H, w=W, th=TH, tw=TW,
        mask_rows=mask_rows, mask_cols=mask_cols)

    nll_p, smooth_p = pl.pallas_call(
        kernel,
        out_shape=(jax.ShapeDtypeStruct((N, RB, 1, 128), jnp.float32),
                   jax.ShapeDtypeStruct((N, RB, 1, 128), jnp.float32)),
        grid_spec=pltpu.PrefetchScalarGridSpec(
            num_scalar_prefetch=0,
            grid=(N, RB, CB),
            in_specs=[pl.BlockSpec((1, C, TH, TW), lambda n, rb, cb: (n, 0, rb, cb)),
                      pl.BlockSpec((1, TH, TW), lambda n, rb, cb: (n, rb, cb))],
            out_specs=(pl.BlockSpec((1, 1, 1, 128), lambda n, rb, cb: (n, rb, 0, 0)),
                       pl.BlockSpec((1, 1, 1, 128), lambda n, rb, cb: (n, rb, 0, 0)))),
        compiler_params=pltpu.CompilerParams(
            dimension_semantics=("parallel", "parallel", "arbitrary"),
            vmem_limit_bytes=32 * 1024 * 1024),
    )(y_pred, t)

    # Tiny host-side combine: one f32 per (n, row-block) per quantity.
    nll_sum = jnp.sum(nll_p[..., 0])
    smooth_sum = jnp.sum(smooth_p[..., 0])

    eps = jnp.float32(smooth_factor)
    eps_i = eps / jnp.float32(C)

    if reduction == "mean":
        # fairseq / reference-module semantics: mean over all N*H*W elements
        # (ignored pixels contribute 0 but are still counted in the denominator).
        denom = jnp.float32(M)
        return (1.0 - eps) * (nll_sum / denom) + eps_i * (smooth_sum / denom)
    elif reduction == "sum":
        return (1.0 - eps) * nll_sum + eps_i * smooth_sum
    else:
        # TODO(synk): reduction='none' (per-pixel loss tensor output) not implemented
        raise NotImplementedError("only 'mean' and 'sum' reductions are supported")


def _reference_loss(y_pred, y_true, eps, ignore_index=-100):
    """Plain-JAX reference matching the PyTorch module (reduction='mean', dim=1)."""
    lp = jax.nn.log_softmax(y_pred.astype(jnp.float32), axis=1)  # (N,C,H,W)
    t = y_true[:, None, :, :]
    pad = t == ignore_index
    t_safe = jnp.where(pad, 0, t)
    nll = -jnp.take_along_axis(lp, t_safe, axis=1)
    smooth = -jnp.sum(lp, axis=1, keepdims=True)
    nll = jnp.where(pad, 0.0, nll).mean()
    smooth = jnp.where(pad, 0.0, smooth).mean()
    C = y_pred.shape[1]
    return (1.0 - eps) * nll + (eps / C) * smooth


if __name__ == "__main__":
    N, C, H, W = 2, 4, 16, 16
    smooth_factor = 0.1
    ignore_index = -100

    key = jax.random.PRNGKey(0)
    k1, k2, k3 = jax.random.split(key, 3)
    y_pred = jax.random.normal(k1, (N, C, H, W), dtype=jnp.float32)
    y_true = jax.random.randint(k2, (N, H, W), 0, C, dtype=jnp.int32)
    # mark some pixels as ignored to exercise the ignore_index path
    ignore_mask = jax.random.bernoulli(k3, p=0.1, shape=(N, H, W))
    y_true = jnp.where(ignore_mask, ignore_index, y_true)

    loss = soft_cross_entropy_loss(
        y_pred, y_true,
        smooth_factor=smooth_factor,
        ignore_index=ignore_index,
        reduction="mean",
    )
    loss = jax.block_until_ready(loss)

    ref = _reference_loss(y_pred, y_true, smooth_factor, ignore_index)
    assert jnp.allclose(loss, ref, rtol=1e-5, atol=1e-5), (loss, ref)

    print("KERNEL_OK")
</pallas_src>

<mosaic_0001>
module attributes {stable_mosaic.version = 11 : i64} {
  func.func @_soft_ce_kernel(%arg0: i32, %arg1: i32, %arg2: i32, %arg3: memref<1x4x16x16xf32, #tpu.memory_space<vmem>>, %arg4: memref<1x16x16xi32, #tpu.memory_space<vmem>>, %arg5: memref<1x1x1x128xf32, #tpu.memory_space<vmem>>, %arg6: memref<1x1x1x128xf32, #tpu.memory_space<vmem>>) attributes {dimension_semantics = [#tpu.dimension_semantics<parallel>, #tpu.dimension_semantics<parallel>, #tpu.dimension_semantics<arbitrary>], iteration_bounds = array<i64: 2, 1, 1>, scalar_prefetch = 0 : i64, scratch_operands = 0 : i64, tpu.core_type = #tpu.core_type<tc>, window_params = [{transform_indices = @transform_0, window_bounds = array<i64: 1, 4, 16, 16>}, {transform_indices = @transform_1, window_bounds = array<i64: 1, 16, 16>}, {transform_indices = @transform_2, window_bounds = array<i64: 1, 1, 1, 128>}, {transform_indices = @transform_3, window_bounds = array<i64: 1, 1, 1, 128>}]} {
    %c0_i32 = arith.constant 0 : i32
    %0 = arith.cmpi eq, %arg2, %c0_i32 : i32
    %1 = arith.extui %0 : i1 to i32
    %c0_i32_0 = arith.constant 0 : i32
    %2 = arith.cmpi ne, %1, %c0_i32_0 : i32
    scf.if %2 {
      %cst_34 = arith.constant 0.000000e+00 : f32
      %53 = vector.broadcast %cst_34 : f32 to vector<1x1x1x128xf32>
      %c0_35 = arith.constant 0 : index
      %c0_36 = arith.constant 0 : index
      %c0_37 = arith.constant 0 : index
      %c0_38 = arith.constant 0 : index
      %54 = vector.load %arg5[%c0_35, %c0_36, %c0_37, %c0_38] : memref<1x1x1x128xf32, #tpu.memory_space<vmem>>, vector<1x1x1x128xf32>
      tpu.vector_store %arg5[%c0_35, %c0_36, %c0_37, %c0_38], %53 {strides = array<i32>} : memref<1x1x1x128xf32, #tpu.memory_space<vmem>>, vector<1x1x1x128xf32>,
      %cst_39 = arith.constant 0.000000e+00 : f32
      %55 = vector.broadcast %cst_39 : f32 to vector<1x1x1x128xf32>
      %c0_40 = arith.constant 0 : index
      %c0_41 = arith.constant 0 : index
      %c0_42 = arith.constant 0 : index
      %c0_43 = arith.constant 0 : index
      %56 = vector.load %arg6[%c0_40, %c0_41, %c0_42, %c0_43] : memref<1x1x1x128xf32, #tpu.memory_space<vmem>>, vector<1x1x1x128xf32>
      tpu.vector_store %arg6[%c0_40, %c0_41, %c0_42, %c0_43], %55 {strides = array<i32>} : memref<1x1x1x128xf32, #tpu.memory_space<vmem>>, vector<1x1x1x128xf32>,
    } else {
    }
    %c0 = arith.constant 0 : index
    %c0_1 = arith.constant 0 : index
    %c0_2 = arith.constant 0 : index
    %c0_3 = arith.constant 0 : index
    %3 = vector.load %arg3[%c0, %c0_1, %c0_2, %c0_3] : memref<1x4x16x16xf32, #tpu.memory_space<vmem>>, vector<1x4x16x16xf32>
    %4 = vector.shape_cast %3 : vector<1x4x16x16xf32> to vector<4x16x16xf32>
    %c0_4 = arith.constant 0 : index
    %c0_5 = arith.constant 0 : index
    %c0_6 = arith.constant 0 : index
    %5 = vector.load %arg4[%c0_4, %c0_5, %c0_6] : memref<1x16x16xi32, #tpu.memory_space<vmem>>, vector<1x16x16xi32>
    %6 = vector.shape_cast %5 : vector<1x16x16xi32> to vector<16x16xi32>
    %cst = arith.constant dense<0xFF800000> : vector<16x16xf32>
    %7 = vector.multi_reduction <maximumf>, %4, %cst [0] : vector<4x16x16xf32> to vector<16x16xf32>
    %8 = vector.shape_cast %7 : vector<16x16xf32> to vector<1x16x16xf32>
    %9 = vector.broadcast %8 : vector<1x16x16xf32> to vector<4x16x16xf32>
    %10 = arith.subf %4, %9 : vector<4x16x16xf32>
    %11 = math.exp %10 : vector<4x16x16xf32>
    %cst_7 = arith.constant dense<0.000000e+00> : vector<16x16xf32>
    %12 = vector.multi_reduction <add>, %11, %cst_7 [0] : vector<4x16x16xf32> to vector<16x16xf32>
    %13 = math.log %12 : vector<16x16xf32>
    %14 = arith.addf %7, %13 : vector<16x16xf32>
    %cst_8 = arith.constant dense<0.000000e+00> : vector<16x16xf32>
    %15 = vector.multi_reduction <add>, %4, %cst_8 [0] : vector<4x16x16xf32> to vector<16x16xf32>
    %16 = tpu.iota {dimensions = array<i32: 0>} : vector<4x16x16xi32>
    %17 = vector.shape_cast %6 : vector<16x16xi32> to vector<1x16x16xi32>
    %18 = vector.broadcast %17 : vector<1x16x16xi32> to vector<4x16x16xi32>
    %19 = arith.cmpi eq, %16, %18 : vector<4x16x16xi32>
    %cst_9 = arith.constant 0.000000e+00 : f32
    %20 = vector.broadcast %cst_9 : f32 to vector<4x16x16xf32>
    %21 = arith.select %19, %4, %20 : vector<4x16x16xi1>, vector<4x16x16xf32>
    %cst_10 = arith.constant dense<0.000000e+00> : vector<16x16xf32>
    %22 = vector.multi_reduction <add>, %21, %cst_10 [0] : vector<4x16x16xf32> to vector<16x16xf32>
    %23 = arith.subf %14, %22 : vector<16x16xf32>
    %cst_11 = arith.constant 4.000000e+00 : f32
    %24 = vector.broadcast %cst_11 : f32 to vector<16x16xf32>
    %25 = arith.mulf %24, %14 : vector<16x16xf32>
    %26 = arith.subf %25, %15 : vector<16x16xf32>
    %c-100_i32 = arith.constant -100 : i32
    %27 = vector.broadcast %c-100_i32 : i32 to vector<16x16xi32>
    %28 = arith.cmpi ne, %6, %27 : vector<16x16xi32>
    %cst_12 = arith.constant 0.000000e+00 : f32
    %29 = vector.broadcast %cst_12 : f32 to vector<16x16xf32>
    %30 = arith.select %28, %23, %29 : vector<16x16xi1>, vector<16x16xf32>
    %cst_13 = arith.constant 0.000000e+00 : f32
    %31 = vector.broadcast %cst_13 : f32 to vector<16x16xf32>
    %32 = arith.select %28, %26, %31 : vector<16x16xi1>, vector<16x16xf32>
    %cst_14 = arith.constant dense<0.000000e+00> : vector<16xf32>
    %33 = vector.multi_reduction <add>, %30, %cst_14 [0] : vector<16x16xf32> to vector<16xf32>
    %34 = vector.shape_cast %33 : vector<16xf32> to vector<1x16xf32>
    %cst_15 = arith.constant dense<0.000000e+00> : vector<1xf32>
    %35 = vector.multi_reduction <add>, %34, %cst_15 [1] : vector<1x16xf32> to vector<1xf32>
    %36 = vector.shape_cast %35 : vector<1xf32> to vector<1x1xf32>
    %cst_16 = arith.constant dense<0.000000e+00> : vector<16xf32>
    %37 = vector.multi_reduction <add>, %32, %cst_16 [0] : vector<16x16xf32> to vector<16xf32>
    %38 = vector.shape_cast %37 : vector<16xf32> to vector<1x16xf32>
    %cst_17 = arith.constant dense<0.000000e+00> : vector<1xf32>
    %39 = vector.multi_reduction <add>, %38, %cst_17 [1] : vector<1x16xf32> to vector<1xf32>
    %40 = vector.shape_cast %39 : vector<1xf32> to vector<1x1xf32>
    %c0_18 = arith.constant 0 : index
    %c0_19 = arith.constant 0 : index
    %c0_20 = arith.constant 0 : index
    %c0_21 = arith.constant 0 : index
    %41 = vector.load %arg5[%c0_18, %c0_19, %c0_20, %c0_21] : memref<1x1x1x128xf32, #tpu.memory_space<vmem>>, vector<1x1x1x128xf32>
    %42 = vector.shape_cast %36 : vector<1x1xf32> to vector<1x1x1x1xf32>
    %43 = vector.shape_cast %42 : vector<1x1x1x1xf32> to vector<1x1x1x1xf32>
    %44 = vector.broadcast %43 : vector<1x1x1x1xf32> to vector<1x1x1x128xf32>
    %45 = arith.addf %41, %44 : vector<1x1x1x128xf32>
    %c0_22 = arith.constant 0 : index
    %c0_23 = arith.constant 0 : index
    %c0_24 = arith.constant 0 : index
    %c0_25 = arith.constant 0 : index
    %46 = vector.load %arg5[%c0_22, %c0_23, %c0_24, %c0_25] : memref<1x1x1x128xf32, #tpu.memory_space<vmem>>, vector<1x1x1x128xf32>
    tpu.vector_store %arg5[%c0_22, %c0_23, %c0_24, %c0_25], %45 {strides = array<i32>} : memref<1x1x1x128xf32, #tpu.memory_space<vmem>>, vector<1x1x1x128xf32>,
    %c0_26 = arith.constant 0 : index
    %c0_27 = arith.constant 0 : index
    %c0_28 = arith.constant 0 : index
    %c0_29 = arith.constant 0 : index
    %47 = vector.load %arg6[%c0_26, %c0_27, %c0_28, %c0_29] : memref<1x1x1x128xf32, #tpu.memory_space<vmem>>, vector<1x1x1x128xf32>
    %48 = vector.shape_cast %40 : vector<1x1xf32> to vector<1x1x1x1xf32>
    %49 = vector.shape_cast %48 : vector<1x1x1x1xf32> to vector<1x1x1x1xf32>
    %50 = vector.broadcast %49 : vector<1x1x1x1xf32> to vector<1x1x1x128xf32>
    %51 = arith.addf %47, %50 : vector<1x1x1x128xf32>
    %c0_30 = arith.constant 0 : index
    %c0_31 = arith.constant 0 : index
    %c0_32 = arith.constant 0 : index
    %c0_33 = arith.constant 0 : index
    %52 = vector.load %arg6[%c0_30, %c0_31, %c0_32, %c0_33] : memref<1x1x1x128xf32, #tpu.memory_space<vmem>>, vector<1x1x1x128xf32>
    tpu.vector_store %arg6[%c0_30, %c0_31, %c0_32, %c0_33], %51 {strides = array<i32>} : memref<1x1x1x128xf32, #tpu.memory_space<vmem>>, vector<1x1x1x128xf32>,
    return
  }
  func.func @transform_0(%arg0: i32, %arg1: i32, %arg2: i32) -> (i32, i32, i32, i32) {
    %c0_i32 = arith.constant 0 : i32
    %c0_i32_0 = arith.constant 0 : i32
    return %arg0, %c0_i32, %arg1, %arg2 : i32, i32, i32, i32
  }
  func.func @transform_1(%arg0: i32, %arg1: i32, %arg2: i32) -> (i32, i32, i32) {
    %c0_i32 = arith.constant 0 : i32
    return %arg0, %arg1, %arg2 : i32, i32, i32
  }
  func.func @transform_2(%arg0: i32, %arg1: i32, %arg2: i32) -> (i32, i32, i32, i32) {
    %c0_i32 = arith.constant 0 : i32
    %c0_i32_0 = arith.constant 0 : i32
    %c0_i32_1 = arith.constant 0 : i32
    return %arg0, %arg1, %c0_i32, %c0_i32_0 : i32, i32, i32, i32
  }
  func.func @transform_3(%arg0: i32, %arg1: i32, %arg2: i32) -> (i32, i32, i32, i32) {
    %c0_i32 = arith.constant 0 : i32
    %c0_i32_0 = arith.constant 0 : i32
    %c0_i32_1 = arith.constant 0 : i32
    return %arg0, %arg1, %c0_i32, %c0_i32_0 : i32, i32, i32, i32
  }
}

</mosaic_0001>

<llo_original>
// kernel: tpu_custom_call.1
$region0: #{tpu_custom_call.1}
  #allocation0 [shape = 'u32[]', space=smem, size = 0x4, offset = 0x4, fixed_abs, tag = 'smem constant byte address 0x4 - core index']
  #allocation1 [shape = 'u32[72,128]{1,0:T(1,128)}', space=vmem, size = 0x9000, scoped, tag = 'internal scratch']
  %s0 = inlined_call_operand.hbm [shape: f32[2,4,16,16], index: 0, kind: input, shape index: {}]
  %s1 = inlined_call_operand.hbm [shape: s32[2,16,16], index: 1, kind: input, shape index: {}]
  %s2 = inlined_call_operand.hbm [shape: f32[2,1,1,128], index: 2, kind: output, shape index: {0}]
  %s3 = inlined_call_operand.hbm [shape: f32[2,1,1,128], index: 3, kind: output, shape index: {1}]
  %4 = xla_tuple %s2, %s3
  %s5 = sld [smem:[#allocation0]]
  $region61: #{tpu_custom_call.1} parent=0
    _
  %s7 = ssub.s32 1, %s5
  %s8 = scalar_select 0, %s7, %s5
  $region1: #{tpu_custom_call.1} parent=0
    #allocation2 [shape = 'u8[65536]{0}', space=vmem, size = 0x10000, scoped, tag = 'input window, operand 0']
    #allocation3 [shape = 's32[2]{0}', space=sflag, size = 0x8, scoped, tag = 'scoped memory for tpu_custom_call.1']
    #allocation4 [shape = 's32[2]{0}', space=sflag, size = 0x8, scoped, tag = 'scoped memory for tpu_custom_call.1']
    #allocation5 [shape = 'u8[16384]{0}', space=vmem, size = 0x4000, scoped, tag = 'input window, operand 1']
    #allocation6 [shape = 's32[2]{0}', space=sflag, size = 0x8, scoped, tag = 'scoped memory for tpu_custom_call.1']
    #allocation7 [shape = 'u8[1024]{0}', space=vmem, size = 0x400, scoped, tag = 'output window, operand 0']
    #allocation8 [shape = 'u8[1024]{0}', space=vmem, size = 0x400, scoped, tag = 'output window, operand 1']
    #allocation9 [shape = 's32[2]{0}', space=sflag, size = 0x8, scoped, tag = 'scoped memory for tpu_custom_call.1']
    %9 = vsyncpa [#allocation3], 0
    %s10 = scalar_lea.sflag [#allocation3], 1
    %11 = vsyncpa %s10, 0
    %12 = vsyncpa [#allocation6], 0
    %s13 = scalar_lea.sflag [#allocation6], 1
    %14 = vsyncpa %s13, 0
    %15 = vsyncpa [#allocation4], 0
    %s16 = scalar_lea.sflag [#allocation4], 1
    %17 = vsyncpa %s16, 0
    %18 = vsyncpa [#allocation9], 0
    %s19 = scalar_lea.sflag [#allocation9], 1
    %20 = vsyncpa %s19, 0
    loop: start=0, step=1, limit=4
    $region2: #{tpu_custom_call.1} parent=1 // loop_pre_header
      _
    $region3: #{tpu_custom_call.1} parent=1 // loop_header
      %s22 = sphi 0, %s26
      %p23 = scmp.ge.s32.totalorder %s22, 4
      %s29 = sphi 0, %s48
      %s30 = sphi 0, %s44
      %s31 = sphi 0, %s40
      %s32 = sphi 0, %s29
      %s33 = sphi 0, %s30
      %s34 = sphi 0, %s31
      %s35 = sphi 0, %s32
      %s36 = sphi 0, %s33
      %s37 = sphi 0, %s34
      %s55 = sphi 0, %s57
      %s58 = sphi 0, %s55
      %s59 = sphi 0, %s58
      %s75 = sphi 0, %s59
      %s85 = sphi 0, %s87
      %s88 = sphi 0, %s85
      %s89 = sphi 0, %s88
      %s105 = sphi 0, %s89
      %s113 = sphi 0, %s115
      %s116 = sphi 0, %s113
      %s117 = sphi 0, %s116
      %s133 = sphi 0, %s117
      %s141 = sphi 0, %s143
      %s144 = sphi 0, %s141
      %s145 = sphi 0, %s144
      %s161 = sphi 0, %s145
    $region4: #{tpu_custom_call.1} parent=1 // loop_header_branch
      %25 = sbr.rel (%p23) target = $region8
    $region5: #{tpu_custom_call.1} parent=1 // loop_body
      %s27 = ssub.s32 %s22, 1
      %s28 = ssub.s32 %s22, 2
      %s38 = sadd.s32 1, %s31
      %p39 = scmp.ge.s32.totalorder %s38, 1
      %s40 = scalar_select %p39, 0, %s38
      %s41 = sadd.s32 1, %s30
      %s42 = scalar_select %p39, %s41, %s30
      %p43 = scmp.ge.s32.totalorder %s42, 1
      %s44 = scalar_select %p43, 0, %s42
      %s45 = sadd.s32 1, %s29
      %s46 = scalar_select %p43, %s45, %s29
      %p47 = scmp.ge.s32.totalorder %s46, 2
      %s48 = scalar_select %p47, 0, %s46
      %s49 = ssub.s32 %s29, %s48
      %s50 = ssub.s32 %s30, %s44
      %s51 = sor.u32 %s49, %s50
      %s52 = ssub.s32 %s31, %s40
      %s53 = sor.u32 %s51, %s52
      %p54 = scmp.eq.s32.totalorder %s53, 0
      %s56 = sadd.s32 %s55, 1
      %s57 = scalar_select %p54, %s55, %s56
      %p60 = pneg %p54
      %p61 = scmp.eq.s32.totalorder %s22, 1
      %p62 = por %p60, %p61
      %p63 = scmp.ne.s32.totalorder %s55, %s58
      %p64 = scmp.eq.s32.totalorder %s22, 0
      %p65 = por %p63, %p64
      %p66 = scmp.ne.s32.totalorder %s55, %s58
      %p67 = scmp.eq.s32.totalorder %s27, 1
      %p68 = por %p66, %p67
      %p69 = scmp.ne.s32.totalorder %s58, %s59
      %p70 = scmp.eq.s32.totalorder %s27, 0
      %p71 = por %p69, %p70
      %p72 = scmp.ne.s32.totalorder %s58, %s59
      %p73 = scmp.eq.s32.totalorder %s28, 1
      %p74 = por %p72, %p73
      %p76 = scmp.ne.s32.totalorder %s59, %s75
      %p77 = scmp.eq.s32.totalorder %s28, 0
      %p78 = por %p76, %p77
      %s79 = ssub.s32 %s29, %s48
      %s80 = ssub.s32 %s30, %s44
      %s81 = sor.u32 %s79, %s80
      %s82 = ssub.s32 %s31, %s40
      %s83 = sor.u32 %s81, %s82
      %p84 = scmp.eq.s32.totalorder %s83, 0
      %s86 = sadd.s32 %s85, 1
      %s87 = scalar_select %p84, %s85, %s86
      %p90 = pneg %p84
      %p91 = scmp.eq.s32.totalorder %s22, 1
      %p92 = por %p90, %p91
      %p93 = scmp.ne.s32.totalorder %s85, %s88
      %p94 = scmp.eq.s32.totalorder %s22, 0
      %p95 = por %p93, %p94
      %p96 = scmp.ne.s32.totalorder %s85, %s88
      %p97 = scmp.eq.s32.totalorder %s27, 1
      %p98 = por %p96, %p97
      %p99 = scmp.ne.s32.totalorder %s88, %s89
      %p100 = scmp.eq.s32.totalorder %s27, 0
      %p101 = por %p99, %p100
      %p102 = scmp.ne.s32.totalorder %s88, %s89
      %p103 = scmp.eq.s32.totalorder %s28, 1
      %p104 = por %p102, %p103
      %p106 = scmp.ne.s32.totalorder %s89, %s105
      %p107 = scmp.eq.s32.totalorder %s28, 0
      %p108 = por %p106, %p107
      %s109 = ssub.s32 %s29, %s48
      %s110 = ssub.s32 %s30, %s44
      %s111 = sor.u32 %s109, %s110
      %p112 = scmp.eq.s32.totalorder %s111, 0
      %s114 = sadd.s32 %s113, 1
      %s115 = scalar_select %p112, %s113, %s114
      %p118 = pneg %p112
      %p119 = scmp.eq.s32.totalorder %s22, 1
      %p120 = por %p118, %p119
      %p121 = scmp.ne.s32.totalorder %s113, %s116
      %p122 = scmp.eq.s32.totalorder %s22, 0
      %p123 = por %p121, %p122
      %p124 = scmp.ne.s32.totalorder %s113, %s116
      %p125 = scmp.eq.s32.totalorder %s27, 1
      %p126 = por %p124, %p125
      %p127 = scmp.ne.s32.totalorder %s116, %s117
      %p128 = scmp.eq.s32.totalorder %s27, 0
      %p129 = por %p127, %p128
      %p130 = scmp.ne.s32.totalorder %s116, %s117
      %p131 = scmp.eq.s32.totalorder %s28, 1
      %p132 = por %p130, %p131
      %p134 = scmp.ne.s32.totalorder %s117, %s133
      %p135 = scmp.eq.s32.totalorder %s28, 0
      %p136 = por %p134, %p135
      %s137 = ssub.s32 %s29, %s48
      %s138 = ssub.s32 %s30, %s44
      %s139 = sor.u32 %s137, %s138
      %p140 = scmp.eq.s32.totalorder %s139, 0
      %s142 = sadd.s32 %s141, 1
      %s143 = scalar_select %p140, %s141, %s142
      %p146 = pneg %p140
      %p147 = scmp.eq.s32.totalorder %s22, 1
      %p148 = por %p146, %p147
      %p149 = scmp.ne.s32.totalorder %s141, %s144
      %p150 = scmp.eq.s32.totalorder %s22, 0
      %p151 = por %p149, %p150
      %p152 = scmp.ne.s32.totalorder %s141, %s144
      %p153 = scmp.eq.s32.totalorder %s27, 1
      %p154 = por %p152, %p153
      %p155 = scmp.ne.s32.totalorder %s144, %s145
      %p156 = scmp.eq.s32.totalorder %s27, 0
      %p157 = por %p155, %p156
      %p158 = scmp.ne.s32.totalorder %s144, %s145
      %p159 = scmp.eq.s32.totalorder %s28, 1
      %p160 = por %p158, %p159
      %p162 = scmp.ne.s32.totalorder %s145, %s161
      %p163 = scmp.eq.s32.totalorder %s28, 0
      %p164 = por %p162, %p163
      %p165 = scmp.le.s32.totalorder 1, %s22
      %p166 = scmp.lt.s32.totalorder %s22, 3
      %p167 = pnand %p165, %p166
      %p168 = pneg %p167
      // Predicated region
      $region9: #{tpu_custom_call.1} parent=5 // pred_check
        _
      $region10: #{tpu_custom_call.1} parent=5 // pred_check_branch
        %170 = sbr.rel (%p167) target = $region12
      $region11: #{tpu_custom_call.1} parent=5 // pred_region
        %s171 = ssub.s32 %s22, 1
      $region12: #{tpu_custom_call.1} parent=5 // pred_fallthru
        _
      %p172 = scmp.lt.s32.totalorder %s22, 2
      // Predicated region
      $region13: #{tpu_custom_call.1} parent=5 // pred_check
        %p173 = pneg %p172
      $region14: #{tpu_custom_call.1} parent=5 // pred_check_branch
        %175 = sbr.rel (%p173) target = $region16
      $region15: #{tpu_custom_call.1} parent=5 // pred_region
        // Predicated region
        $region17: #{tpu_custom_call.1} parent=15 // pred_check
          %p176 = pneg %p65
        $region18: #{tpu_custom_call.1} parent=15 // pred_check_branch
          %178 = sbr.rel (%p176) target = $region20
        $region19: #{tpu_custom_call.1} parent=15 // pred_region
          %s179 = sand.u32 %s55, 1
          %s180 = scalar_lea.sflag [#allocation3], %s179
          %s181 = sand.u32 %s55, 1
          %s182 = smul.addr %s181, 64
          %s183 = scalar_lea.vmem [#allocation2], %s182
          %s184 = smul.u32 2, %s30
          %186 = vsyncadd %s180, 0
          %s187 = sadd.s32 %s31, %s184
          %s188 = smul.addr %s29, 8
          %s189 = sadd.s32 %s187, %s188
          %s190 = smul.addr %s189, 8
          %s191 = scalar_lea.hbm %s0, %s190
          %s192 = sshll.u32 %s191, 4
          %s193 = int_to_ptr.hbm [resolvable:$true] %s192
          %s194 = sshll.u32 %s183, 4
          %s195 = int_to_ptr.vmem [resolvable:$true] %s194
          %200 = dma.hbm_to_vmem [thread:$0]  %s193, 1024, %s195, %s180, 128, 128, 8
        $region20: #{tpu_custom_call.1} parent=15 // pred_fallthru
          _
        // Predicated region
        $region21: #{tpu_custom_call.1} parent=15 // pred_check
          %p201 = pneg %p95
        $region22: #{tpu_custom_call.1} parent=15 // pred_check_branch
          %203 = sbr.rel (%p201) target = $region24
        $region23: #{tpu_custom_call.1} parent=15 // pred_region
          %s204 = sand.u32 %s85, 1
          %s205 = scalar_lea.sflag [#allocation6], %s204
          %s206 = sand.u32 %s85, 1
          %s207 = smul.addr %s206, 16
          %s208 = scalar_lea.vmem [#allocation5], %s207
          %s209 = smul.u32 2, %s30
          %211 = vsyncadd %s205, 0
          %s212 = sadd.s32 %s31, %s209
          %s213 = smul.addr %s29, 2
          %s214 = sadd.s32 %s212, %s213
          %s215 = smul.addr %s214, 8
          %s216 = scalar_lea.hbm %s1, %s215
          %s217 = sshll.u32 %s216, 4
          %s218 = int_to_ptr.hbm [resolvable:$true] %s217
          %s219 = sshll.u32 %s208, 4
          %s220 = int_to_ptr.vmem [resolvable:$true] %s219
          %225 = dma.hbm_to_vmem [thread:$0]  %s218, 256, %s220, %s205, 128, 128, 8
        $region24: #{tpu_custom_call.1} parent=15 // pred_fallthru
          _
      $region16: #{tpu_custom_call.1} parent=5 // pred_fallthru
        _
      %p226 = scmp.le.s32.totalorder 1, %s22
      %p227 = scmp.lt.s32.totalorder %s22, 3
      %p228 = pnand %p226, %p227
      %p229 = pneg %p228
      // Predicated region
      $region25: #{tpu_custom_call.1} parent=5 // pred_check
        _
      $region26: #{tpu_custom_call.1} parent=5 // pred_check_branch
        %231 = sbr.rel (%p228) target = $region28
      $region27: #{tpu_custom_call.1} parent=5 // pred_region
        %s232 = ssub.s32 %s22, 1
        %s233 = sand.u32 %s58, 1
        %s234 = scalar_lea.sflag [#allocation3], %s233
        %s235 = sand.u32 %s58, 1
        %s236 = smul.addr %s235, 64
        %s237 = scalar_lea.vmem [#allocation2], %s236
        // Predicated region
        $region29: #{tpu_custom_call.1} parent=27 // pred_check
          %p238 = pneg %p71
        $region30: #{tpu_custom_call.1} parent=27 // pred_check_branch
          %240 = sbr.rel (%p238) target = $region32
        $region31: #{tpu_custom_call.1} parent=27 // pred_region
          %242 = dma.done %s234, 1024
        $region32: #{tpu_custom_call.1} parent=27 // pred_fallthru
          _
        %s243 = sand.u32 %s88, 1
        %s244 = scalar_lea.sflag [#allocation6], %s243
        %s245 = sand.u32 %s88, 1
        %s246 = smul.addr %s245, 16
        %s247 = scalar_lea.vmem [#allocation5], %s246
        // Predicated region
        $region33: #{tpu_custom_call.1} parent=27 // pred_check
          %p248 = pneg %p101
        $region34: #{tpu_custom_call.1} parent=27 // pred_check_branch
          %250 = sbr.rel (%p248) target = $region36
        $region35: #{tpu_custom_call.1} parent=27 // pred_region
          %252 = dma.done %s244, 256
        $region36: #{tpu_custom_call.1} parent=27 // pred_fallthru
          _
        %s253 = sand.u32 %s58, 1
        %s254 = scalar_lea.sflag [#allocation3], %s253
        %s255 = sand.u32 %s58, 1
        %s256 = smul.addr %s255, 64
        %s257 = scalar_lea.vmem [#allocation2], %s256
        %p258 = pneg %p71
        %p259 = pneg %p68
        %s260 = sand.u32 %s88, 1
        %s261 = scalar_lea.sflag [#allocation6], %s260
        %s262 = sand.u32 %s88, 1
        %s263 = smul.addr %s262, 16
        %s264 = scalar_lea.vmem [#allocation5], %s263
        %p265 = pneg %p101
        %p266 = pneg %p98
        %p267 = pneg %p129
        %p268 = pneg %p126
        %s269 = sand.u32 %s116, 1
        %s270 = scalar_lea.sflag [#allocation4], %s269
        %s271 = sand.u32 %s116, 1
        %s272 = scalar_lea.vmem [#allocation7], %s271
        %p273 = pneg %p157
        %p274 = pneg %p154
        %s275 = sand.u32 %s144, 1
        %s276 = scalar_lea.sflag [#allocation9], %s275
        %s277 = sand.u32 %s144, 1
        %s278 = scalar_lea.vmem [#allocation8], %s277
        %s279 = smul.u32 2, %s33
        %s280 = smul.u32 2, %s33
        %p281 = scmp.eq.s32.totalorder %s34, 0
        // Predicated region
        $region37: #{tpu_custom_call.1} parent=27 // pred_check
          %p282 = pneg %p281
        $region38: #{tpu_custom_call.1} parent=27 // pred_check_branch
          %284 = sbr.rel (%p282) target = $region40
        $region39: #{tpu_custom_call.1} parent=27 // pred_region
          %285 = vst [vmem:[%s272] sm:$0x1] 0.0
          %286 = vst [vmem:[%s278] sm:$0x1] 0.0
        $region40: #{tpu_custom_call.1} parent=27 // pred_fallthru
          _
        %v287 = vld [vmem:[%s237] sm:$0xff]
        %v288 = vld [vmem:[%s237 + $0x8] sm:$0xff]
        %v289 = vld [vmem:[%s237 + $0x10] sm:$0xff]
        %v290 = vld [vmem:[%s237 + $0x18] sm:$0xff]
        %v291 = vld [vmem:[%s237 + $0x20] sm:$0xff]
        %v292 = vld [vmem:[%s237 + $0x28] sm:$0xff]
        %v293 = vld [vmem:[%s237 + $0x30] sm:$0xff]
        %v294 = vld [vmem:[%s237 + $0x38] sm:$0xff]
        %v295 = vld [vmem:[%s247] sm:$0xff]
        %v296 = vld [vmem:[%s247 + $0x8] sm:$0xff]
        %vm297 = vcmask 130048
        %v298 = vsel %vm297, %v287, -inf
        %v299 = vsel %vm297, %v289, -inf
        %v300 = vsel %vm297, %v291, -inf
        %v301 = vmax.f32 %v298, %v300
        %v302 = vsel %vm297, %v293, -inf
        %v303 = vmax.f32 %v299, %v302
        %v304 = vmax.f32 %v301, %v303
        %v305 = vsel %vm297, %v288, -inf
        %v306 = vsel %vm297, %v290, -inf
        %v307 = vsel %vm297, %v292, -inf
        %v308 = vmax.f32 %v305, %v307
        %v309 = vsel %vm297, %v294, -inf
        %v310 = vmax.f32 %v306, %v309
        %v311 = vmax.f32 %v308, %v310
        %v312 = vsub.f32 %v287, %v304
        %v313 = vsub.f32 %v288, %v311
        %v314 = vsub.f32 %v289, %v304
        %v315 = vsub.f32 %v290, %v311
        %v316 = vsub.f32 %v291, %v304
        %v317 = vsub.f32 %v292, %v311
        %v318 = vsub.f32 %v293, %v304
        %v319 = vsub.f32 %v294, %v311
        %v320 = vmul.f32 %v312, 1.442695
        %v321 = vpow.pop %v320
        %v322 = vmul.f32 %v313, 1.442695
        %v323 = vpow.pop %v322
        %v324 = vmul.f32 %v314, 1.442695
        %v325 = vpow.pop %v324
        %v326 = vmul.f32 %v315, 1.442695
        %v327 = vpow.pop %v326
        %v328 = vmul.f32 %v316, 1.442695
        %v329 = vpow.pop %v328
        %v330 = vmul.f32 %v317, 1.442695
        %v331 = vpow.pop %v330
        %v332 = vmul.f32 %v318, 1.442695
        %v333 = vpow.pop %v332
        %v334 = vmul.f32 %v319, 1.442695
        %v335 = vpow.pop %v334
        %v336 = vsel %vm297, %v321, 0.0
        %v337 = vsel %vm297, %v325, 0.0
        %v338 = vadd.f32 %v336, %v337
        %v339 = vsel %vm297, %v329, 0.0
        %v340 = vadd.f32 %v338, %v339
        %v341 = vsel %vm297, %v333, 0.0
        %v342 = vadd.f32 %v340, %v341
        %v343 = vsel %vm297, %v323, 0.0
        %v344 = vsel %vm297, %v327, 0.0
        %v345 = vadd.f32 %v343, %v344
        %v346 = vsel %vm297, %v331, 0.0
        %v347 = vadd.f32 %v345, %v346
        %v348 = vsel %vm297, %v335, 0.0
        %v349 = vadd.f32 %v347, %v348
        %v350 = vlog2.pop %v342
        %v351 = vmul.f32 %v350, 0.6931472
        %v352 = vlog2.pop %v349
        %v353 = vmul.f32 %v352, 0.6931472
        %v354 = vadd.f32 %v304, %v351
        %v355 = vadd.f32 %v311, %v353
        %v356 = vsel %vm297, %v287, 0.0
        %v357 = vsel %vm297, %v289, 0.0
        %v358 = vadd.f32 %v356, %v357
        %v359 = vsel %vm297, %v291, 0.0
        %v360 = vadd.f32 %v358, %v359
        %v361 = vsel %vm297, %v293, 0.0
        %v362 = vadd.f32 %v360, %v361
        %v363 = vsel %vm297, %v288, 0.0
        %v364 = vsel %vm297, %v290, 0.0
        %v365 = vadd.f32 %v363, %v364
        %v366 = vsel %vm297, %v292, 0.0
        %v367 = vadd.f32 %v365, %v366
        %v368 = vsel %vm297, %v294, 0.0
        %v369 = vadd.f32 %v367, %v368
        %vm370 = vcmp.eq.s32.totalorder %v295, 0
        %vm371 = vcmp.eq.s32.totalorder %v296, 0
        %vm372 = vcmp.eq.s32.totalorder %v295, 1
        %vm373 = vcmp.eq.s32.totalorder %v296, 1
        %vm374 = vcmp.eq.s32.totalorder %v295, 2
        %vm375 = vcmp.eq.s32.totalorder %v296, 2
        %vm376 = vcmp.eq.s32.totalorder %v295, 3
        %vm377 = vcmp.eq.s32.totalorder %v296, 3
        %v378 = vsel %vm370, %v287, 0.0
        %v379 = vsel %vm371, %v288, 0.0
        %v380 = vsel %vm372, %v289, 0.0
        %v381 = vsel %vm373, %v290, 0.0
        %v382 = vsel %vm374, %v291, 0.0
        %v383 = vsel %vm375, %v292, 0.0
        %v384 = vsel %vm376, %v293, 0.0
        %v385 = vsel %vm377, %v294, 0.0
        %v386 = vsel %vm297, %v378, 0.0
        %v387 = vsel %vm297, %v380, 0.0
        %v388 = vadd.f32 %v386, %v387
        %v389 = vsel %vm297, %v382, 0.0
        %v390 = vadd.f32 %v388, %v389
        %v391 = vsel %vm297, %v384, 0.0
        %v392 = vadd.f32 %v390, %v391
        %v393 = vsel %vm297, %v379, 0.0
        %v394 = vsel %vm297, %v381, 0.0
        %v395 = vadd.f32 %v393, %v394
        %v396 = vsel %vm297, %v383, 0.0
        %v397 = vadd.f32 %v395, %v396
        %v398 = vsel %vm297, %v385, 0.0
        %v399 = vadd.f32 %v397, %v398
        %v400 = vsub.f32 %v354, %v392
        %v401 = vsub.f32 %v355, %v399
        %v402 = vmul.f32 %v354, 4.0
        %v403 = vmul.f32 %v355, 4.0
        %v404 = vsub.f32 %v402, %v362
        %v405 = vsub.f32 %v403, %v369
        %vm406 = vcmp.ne.s32.totalorder %v295, 4294967196
        %vm407 = vcmp.ne.s32.totalorder %v296, 4294967196
        %v408 = vsel %vm406, %v400, 0.0
        %v409 = vsel %vm407, %v401, 0.0
        %v410 = vsel %vm406, %v404, 0.0
        %v411 = vsel %vm407, %v405, 0.0
        %v412 = vsel %vm297, %v408, 0.0
        %v413 = vsel %vm297, %v409, 0.0
        %v414 = vadd.f32 %v412, %v413
        %v415 = vrot.slane %v414, 4
        %v416 = vadd.f32 %v414, %v415
        %v417 = vrot.slane %v416, 2
        %v418 = vadd.f32 %v416, %v417
        %v419 = vrot.slane %v418, 1
        %v420 = vadd.f32 %v418, %v419
        %v421 = vsel %vm297, %v420, 0.0
        %422 = vadd.xlane.f32.xlu0 %v421
        %v423 = vpop.xlane.xlu0 %422
        %v424 = vsel %vm297, %v410, 0.0
        %v425 = vsel %vm297, %v411, 0.0
        %v426 = vadd.f32 %v424, %v425
        %v427 = vrot.slane %v426, 4
        %v428 = vadd.f32 %v426, %v427
        %v429 = vrot.slane %v428, 2
        %v430 = vadd.f32 %v428, %v429
        %v431 = vrot.slane %v430, 1
        %v432 = vadd.f32 %v430, %v431
        %v433 = vsel %vm297, %v432, 0.0
        %434 = vadd.xlane.f32.xlu0 %v433
        %v435 = vpop.xlane.xlu0 %434
        %v436 = vld [vmem:[%s272] sm:$0x1]
        %v437 = vadd.f32 %v436, %v423
        %438 = vst [vmem:[%s272] sm:$0x1] %v437
        %v439 = vld [vmem:[%s278] sm:$0x1]
        %v440 = vadd.f32 %v439, %v435
        %441 = vst [vmem:[%s278] sm:$0x1] %v440
        %s442 = sand.u32 %s116, 1
        %s443 = scalar_lea.sflag [#allocation4], %s442
        %s444 = sand.u32 %s116, 1
        %s445 = scalar_lea.vmem [#allocation7], %s444
        %s446 = sand.u32 %s144, 1
        %s447 = scalar_lea.sflag [#allocation9], %s446
        %s448 = sand.u32 %s144, 1
        %s449 = scalar_lea.vmem [#allocation8], %s448
        // Predicated region
        $region41: #{tpu_custom_call.1} parent=27 // pred_check
          %p450 = pneg %p126
        $region42: #{tpu_custom_call.1} parent=27 // pred_check_branch
          %452 = sbr.rel (%p450) target = $region44
        $region43: #{tpu_custom_call.1} parent=27 // pred_region
          %454 = vsyncadd %s443, 0
          %s455 = sadd.s32 %s33, %s32
          %s456 = scalar_lea.hbm %s2, %s455
          %s458 = sshll.u32 %s445, 4
          %s459 = int_to_ptr.vmem [resolvable:$true] %s458
          %s460 = sshll.u32 %s456, 4
          %s461 = int_to_ptr.hbm [resolvable:$true] %s460
          %463 = dma.vmem_to_hbm [thread:$0]  %s459, 16, %s461, %s443
        $region44: #{tpu_custom_call.1} parent=27 // pred_fallthru
          _
        // Predicated region
        $region45: #{tpu_custom_call.1} parent=27 // pred_check
          %p464 = pneg %p154
        $region46: #{tpu_custom_call.1} parent=27 // pred_check_branch
          %466 = sbr.rel (%p464) target = $region48
        $region47: #{tpu_custom_call.1} parent=27 // pred_region
          %468 = vsyncadd %s447, 0
          %s469 = sadd.s32 %s33, %s32
          %s470 = scalar_lea.hbm %s3, %s469
          %s472 = sshll.u32 %s449, 4
          %s473 = int_to_ptr.vmem [resolvable:$true] %s472
          %s474 = sshll.u32 %s470, 4
          %s475 = int_to_ptr.hbm [resolvable:$true] %s474
          %477 = dma.vmem_to_hbm [thread:$0]  %s473, 16, %s475, %s447
        $region48: #{tpu_custom_call.1} parent=27 // pred_fallthru
          _
      $region28: #{tpu_custom_call.1} parent=5 // pred_fallthru
        _
      %p478 = scmp.le.s32.totalorder 2, %s22
      // Predicated region
      $region49: #{tpu_custom_call.1} parent=5 // pred_check
        %p479 = pneg %p478
      $region50: #{tpu_custom_call.1} parent=5 // pred_check_branch
        %481 = sbr.rel (%p479) target = $region52
      $region51: #{tpu_custom_call.1} parent=5 // pred_region
        %s482 = ssub.s32 %s22, 2
        // Predicated region
        $region53: #{tpu_custom_call.1} parent=51 // pred_check
          %p483 = pneg %p132
        $region54: #{tpu_custom_call.1} parent=51 // pred_check_branch
          %485 = sbr.rel (%p483) target = $region56
        $region55: #{tpu_custom_call.1} parent=51 // pred_region
          %s486 = sand.u32 %s117, 1
          %s487 = scalar_lea.sflag [#allocation4], %s486
          %s488 = sand.u32 %s117, 1
          %s489 = scalar_lea.vmem [#allocation7], %s488
          %491 = dma.done %s487, 16
        $region56: #{tpu_custom_call.1} parent=51 // pred_fallthru
          _
        // Predicated region
        $region57: #{tpu_custom_call.1} parent=51 // pred_check
          %p492 = pneg %p160
        $region58: #{tpu_custom_call.1} parent=51 // pred_check_branch
          %494 = sbr.rel (%p492) target = $region60
        $region59: #{tpu_custom_call.1} parent=51 // pred_region
          %s495 = sand.u32 %s145, 1
          %s496 = scalar_lea.sflag [#allocation9], %s495
          %s497 = sand.u32 %s145, 1
          %s498 = scalar_lea.vmem [#allocation8], %s497
          %500 = dma.done %s496, 16
        $region60: #{tpu_custom_call.1} parent=51 // pred_fallthru
          _
      $region52: #{tpu_custom_call.1} parent=5 // pred_fallthru
        _
    $region6: #{tpu_custom_call.1} parent=1 // loop_footer
      %s26 = sadd.s32 1, %s22
    $region7: #{tpu_custom_call.1} parent=1 // loop_footer_branch
      %21 = sbr.rel target = $region3
    $region8: #{tpu_custom_call.1} parent=1 // loop_exit
      _
    %501 = vsyncpa [#allocation3], 1
    %s502 = scalar_lea.sflag [#allocation3], 1
    %503 = vsyncpa %s502, 1
    %504 = vsyncpa [#allocation6], 1
    %s505 = scalar_lea.sflag [#allocation6], 1
    %506 = vsyncpa %s505, 1
    %507 = vsyncpa [#allocation4], 1
    %s508 = scalar_lea.sflag [#allocation4], 1
    %509 = vsyncpa %s508, 1
    %510 = vsyncpa [#allocation9], 1
    %s511 = scalar_lea.sflag [#allocation9], 1
    %512 = vsyncpa %s511, 1

</llo_original>
